<compile_context>
chip_gen: v6e
topology: v6e:2x2x1
jax: 0.10.0
libtpu: 0.0.40
codegen_flags: <defaults>
</compile_context>

<pallas_src>
import functools

import jax
import jax.numpy as jnp
from jax.experimental import pallas as pl
from jax.experimental.pallas import tpu as pltpu


def _round_up(x, m):
    return ((x + m - 1) // m) * m


def linear_kernel(x_ref, w_ref, b_ref, o_ref):
    # x_ref: (R, 128, F) VMEM tile of the batch (R rows-of-128 per grid step)
    # w_ref: (1, F) VMEM, resident across the grid
    # b_ref: (1,)  SMEM scalar bias
    # o_ref: (R, 128) VMEM, lane-dense output slab
    x = x_ref[...]                              # (R, 128, F)
    w = w_ref[...]                              # (1, F) -> broadcasts over x
    prod = x * w                                # VPU elementwise
    acc = jnp.sum(prod, axis=-1)                # XLU lane reduce -> (R, 128)
    o_ref[...] = (acc + b_ref[0]).astype(o_ref.dtype)


@functools.partial(jax.jit, static_argnames=("tb",))
def linear_net(x, w, b, *, tb=32768):
    """y = x @ w.T + b  (nn.Linear(F, 1) forward).

    x: (B, F) f32, w: (1, F) f32 (PyTorch weight layout), b: (1,) f32 -> (B, 1).
    """
    B, F = x.shape

    # Pick a lane-friendly batch tile: multiple of 128 always; multiple of 1024
    # when the grid has more than one step so the output block's sublane dim
    # (tile/128) is a multiple of 8.
    b_pad_min = _round_up(B, 128)
    if b_pad_min <= tb:
        tb_eff = b_pad_min                      # single grid step
    else:
        tb_eff = _round_up(tb, 1024)
    B_pad = _round_up(B, tb_eff)
    grid = B_pad // tb_eff
    R = tb_eff // 128                           # rows-of-128 per tile

    x_pad = x if B_pad == B else jnp.pad(x, ((0, B_pad - B), (0, 0)))
    # Layout plumbing only (contiguous reshape): present the batch as
    # (rows_of_128, 128, F) so the out block's last dim is 128 (lane dense).
    x3 = x_pad.reshape(B_pad // 128, 128, F)

    out = pl.pallas_call(
        linear_kernel,
        out_shape=jax.ShapeDtypeStruct((B_pad // 128, 128), x.dtype),
        grid_spec=pltpu.PrefetchScalarGridSpec(
            num_scalar_prefetch=0,
            grid=(grid,),
            in_specs=[
                pl.BlockSpec((R, 128, F), lambda i: (i, 0, 0)),   # x tile
                pl.BlockSpec((1, F), lambda i: (0, 0)),           # weight (resident)
                pl.BlockSpec(memory_space=pltpu.MemorySpace.SMEM),  # bias scalar
            ],
            out_specs=pl.BlockSpec((R, 128), lambda i: (i, 0)),
        ),
        compiler_params=pltpu.CompilerParams(
            dimension_semantics=("parallel",),
            vmem_limit_bytes=32 * 1024 * 1024,
        ),
        cost_estimate=pl.CostEstimate(
            flops=2 * B_pad * F,
            transcendentals=0,
            bytes_accessed=4 * (B_pad * F + F + B_pad),
        ),
    )(x3, w, b)

    # Back to (B, 1), dropping batch padding.
    return out.reshape(B_pad, 1)[:B]


if __name__ == "__main__":
    n_feature = 32
    batch = 8

    key = jax.random.PRNGKey(0)
    kx, kw, kb, kx2 = jax.random.split(key, 4)

    # Deterministic init mimicking nn.Linear uniform(-1/sqrt(F), 1/sqrt(F)).
    bound = 1.0 / float(n_feature) ** 0.5
    w = jax.random.uniform(kw, (1, n_feature), jnp.float32, -bound, bound)  # PyTorch layout
    b = jax.random.uniform(kb, (1,), jnp.float32, -bound, bound)

    # Small case (single tile).
    x = jax.random.normal(kx, (batch, n_feature), jnp.float32)
    y = linear_net(x, w, b)
    jax.block_until_ready(y)
    y_ref = x @ w.T + b
    assert y.shape == (batch, 1)
    assert jnp.allclose(y, y_ref, atol=1e-5), "mismatch vs reference (small batch)"

    # Multi-tile case (grid > 1) with a reduced tile to exercise the pipeline.
    batch2 = 3000
    x2 = jax.random.normal(kx2, (batch2, n_feature), jnp.float32)
    y2 = linear_net(x2, w, b, tb=1024)
    jax.block_until_ready(y2)
    y2_ref = x2 @ w.T + b
    assert y2.shape == (batch2, 1)
    assert jnp.allclose(y2, y2_ref, atol=1e-5), "mismatch vs reference (tiled batch)"

    print("KERNEL_OK")
</pallas_src>

<mosaic_0001>
module attributes {stable_mosaic.version = 11 : i64} {
  func.func @linear_kernel(%arg0: i32, %arg1: memref<1x128x32xf32, #tpu.memory_space<vmem>>, %arg2: memref<1x32xf32, #tpu.memory_space<vmem>>, %arg3: memref<1xf32, #tpu.memory_space<smem>>, %arg4: memref<1x128xf32, #tpu.memory_space<vmem>>) attributes {dimension_semantics = [#tpu.dimension_semantics<parallel>], iteration_bounds = array<i64: 1>, scalar_prefetch = 0 : i64, scratch_operands = 0 : i64, tpu.core_type = #tpu.core_type<tc>, window_params = [{transform_indices = @transform_0, window_bounds = array<i64: 1, 128, 32>}, {pipeline_mode = #tpu.pipeline_mode<synchronous>, transform_indices = @transform_1, window_bounds = array<i64: 1, 32>}, {transform_indices = @transform_2, window_bounds = array<i64: 1>}, {transform_indices = @transform_3, window_bounds = array<i64: 1, 128>}]} {
    %c0 = arith.constant 0 : index
    %c0_0 = arith.constant 0 : index
    %c0_1 = arith.constant 0 : index
    %0 = vector.load %arg1[%c0, %c0_0, %c0_1] : memref<1x128x32xf32, #tpu.memory_space<vmem>>, vector<1x128x32xf32>
    %c0_2 = arith.constant 0 : index
    %c0_3 = arith.constant 0 : index
    %1 = vector.load %arg2[%c0_2, %c0_3] : memref<1x32xf32, #tpu.memory_space<vmem>>, vector<1x32xf32>
    %2 = vector.shape_cast %1 : vector<1x32xf32> to vector<1x1x32xf32>
    %3 = vector.broadcast %2 : vector<1x1x32xf32> to vector<1x128x32xf32>
    %4 = arith.mulf %0, %3 : vector<1x128x32xf32>
    %cst = arith.constant dense<0.000000e+00> : vector<1x128xf32>
    %5 = vector.multi_reduction <add>, %4, %cst [2] : vector<1x128x32xf32> to vector<1x128xf32>
    %c0_4 = arith.constant 0 : index
    %6 = memref.load %arg3[%c0_4] : memref<1xf32, #tpu.memory_space<smem>>
    %7 = vector.broadcast %6 : f32 to vector<1x128xf32>
    %8 = arith.addf %5, %7 : vector<1x128xf32>
    %c0_5 = arith.constant 0 : index
    %c0_6 = arith.constant 0 : index
    %9 = vector.load %arg4[%c0_5, %c0_6] : memref<1x128xf32, #tpu.memory_space<vmem>>, vector<1x128xf32>
    tpu.vector_store %arg4[%c0_5, %c0_6], %8 {strides = array<i32>} : memref<1x128xf32, #tpu.memory_space<vmem>>, vector<1x128xf32>,
    return
  }
  func.func @transform_0(%arg0: i32) -> (i32, i32, i32) {
    %c0_i32 = arith.constant 0 : i32
    %c0_i32_0 = arith.constant 0 : i32
    %c0_i32_1 = arith.constant 0 : i32
    return %arg0, %c0_i32, %c0_i32_0 : i32, i32, i32
  }
  func.func @transform_1(%arg0: i32) -> (i32, i32) {
    %c0_i32 = arith.constant 0 : i32
    %c0_i32_0 = arith.constant 0 : i32
    %c0_i32_1 = arith.constant 0 : i32
    return %c0_i32, %c0_i32_0 : i32, i32
  }
  func.func @transform_2(%arg0: i32) -> i32 {
    %c0_i32 = arith.constant 0 : i32
    %c0_i32_0 = arith.constant 0 : i32
    return %c0_i32 : i32
  }
  func.func @transform_3(%arg0: i32) -> (i32, i32) {
    %c0_i32 = arith.constant 0 : i32
    %c0_i32_0 = arith.constant 0 : i32
    return %arg0, %c0_i32 : i32, i32
  }
}

</mosaic_0001>

<llo_original>
// kernel: linear_net.1
$region0: #{linear_net.1}
  #allocation0 [shape = 'u32[]', space=smem, size = 0x4, offset = 0x4, fixed_abs, tag = 'smem constant byte address 0x4 - core index']
  #allocation1 [shape = 'u32[144,128]{1,0:T(1,128)}', space=vmem, size = 0x12000, scoped, tag = 'internal scratch']
  #allocation2 [shape = 'f32[1]{0:T(128)S(6)}', space=smem, size = 0x200, scoped, tag = 'scoped memory for linear_net.1']
  %s0 = inlined_call_operand.vmem [shape: f32[1,128,32], index: 0, kind: input, shape index: {}]
  %s1 = inlined_call_operand.vmem [shape: f32[1,32], index: 1, kind: input, shape index: {}]
  %s2 = inlined_call_operand.<no memory space> [shape: f32[1], index: 2, kind: input, shape index: {}]
  %s3 = inlined_call_operand.vmem [shape: f32[1,128], index: 3, kind: output, shape index: {}]
  %s4 = sld [smem:[#allocation0]]
  $region22: #{linear_net.1} parent=0
    _
  %s6 = ssub.s32 1, %s4
  %s7 = scalar_select 0, %s6, %s4
  %8 = sst [smem:[#allocation2]] %s2
  // Predicated region
  $region2: #{linear_net.1} parent=0 // pred_check
    _
  $region3: #{linear_net.1} parent=0 // pred_check_branch
    %10 = sbr.rel (0) target = $region5
  $region4: #{linear_net.1} parent=0 // pred_region
    _
  $region5: #{linear_net.1} parent=0 // pred_fallthru
    _
  // Predicated region
  $region6: #{linear_net.1} parent=0 // pred_check
    _
  $region7: #{linear_net.1} parent=0 // pred_check_branch
    %12 = sbr.rel (0) target = $region9
  $region8: #{linear_net.1} parent=0 // pred_region
    _
  $region9: #{linear_net.1} parent=0 // pred_fallthru
    _
  // Predicated region
  $region10: #{linear_net.1} parent=0 // pred_check
    _
  $region11: #{linear_net.1} parent=0 // pred_check_branch
    %14 = sbr.rel (0) target = $region13
  $region12: #{linear_net.1} parent=0 // pred_region
    _
  $region13: #{linear_net.1} parent=0 // pred_fallthru
    _
  %v15 = vld [vmem:[%s0] sm:$0xff]
  %v16 = vld [vmem:[%s0 + $0x8] sm:$0xff]
  %v17 = vld [vmem:[%s0 + $0x10] sm:$0xff]
  %v18 = vld [vmem:[%s0 + $0x18] sm:$0xff]
  %v19 = vld [vmem:[%s0 + $0x20] sm:$0xff]
  %v20 = vld [vmem:[%s0 + $0x28] sm:$0xff]
  %v21 = vld [vmem:[%s0 + $0x30] sm:$0xff]
  %v22 = vld [vmem:[%s0 + $0x38] sm:$0xff]
  %v23 = vld [vmem:[%s0 + $0x40] sm:$0xff]
  %v24 = vld [vmem:[%s0 + $0x48] sm:$0xff]
  %v25 = vld [vmem:[%s0 + $0x50] sm:$0xff]
  %v26 = vld [vmem:[%s0 + $0x58] sm:$0xff]
  %v27 = vld [vmem:[%s0 + $0x60] sm:$0xff]
  %v28 = vld [vmem:[%s0 + $0x68] sm:$0xff]
  %v29 = vld [vmem:[%s0 + $0x70] sm:$0xff]
  %v30 = vld [vmem:[%s0 + $0x78] sm:$0xff]
  %v31 = vld [vmem:[%s1] sm:$0x1]
  %v33 = vlaneseq
  %v34 = vshrl.u32 %v33, 7
  %v35 = vsub.s32 0, %v34
  %v36 = vrot.slane %v31, %v35
  %v38 = vmul.f32 %v15, %v36
  %v39 = vmul.f32 %v16, %v36
  %v40 = vmul.f32 %v17, %v36
  %v41 = vmul.f32 %v18, %v36
  %v42 = vmul.f32 %v19, %v36
  %v43 = vmul.f32 %v20, %v36
  %v44 = vmul.f32 %v21, %v36
  %v45 = vmul.f32 %v22, %v36
  %v46 = vmul.f32 %v23, %v36
  %v47 = vmul.f32 %v24, %v36
  %v48 = vmul.f32 %v25, %v36
  %v49 = vmul.f32 %v26, %v36
  %v50 = vmul.f32 %v27, %v36
  %v51 = vmul.f32 %v28, %v36
  %v52 = vmul.f32 %v29, %v36
  %v53 = vmul.f32 %v30, %v36
  %vm54 = vcmask 261120
  %v55 = vsel %vm54, %v38, 0.0
  %56 = vadd.xlane.f32.xlu0 %v55
  %v57 = vpop.xlane.xlu0 %56
  %v58 = vsel %vm54, %v39, 0.0
  %59 = vadd.xlane.f32.xlu0 %v58
  %v60 = vpop.xlane.xlu0 %59
  %v61 = vsel %vm54, %v40, 0.0
  %62 = vadd.xlane.f32.xlu0 %v61
  %v63 = vpop.xlane.xlu0 %62
  %v64 = vsel %vm54, %v41, 0.0
  %65 = vadd.xlane.f32.xlu0 %v64
  %v66 = vpop.xlane.xlu0 %65
  %v67 = vsel %vm54, %v42, 0.0
  %68 = vadd.xlane.f32.xlu0 %v67
  %v69 = vpop.xlane.xlu0 %68
  %v70 = vsel %vm54, %v43, 0.0
  %71 = vadd.xlane.f32.xlu0 %v70
  %v72 = vpop.xlane.xlu0 %71
  %v73 = vsel %vm54, %v44, 0.0
  %74 = vadd.xlane.f32.xlu0 %v73
  %v75 = vpop.xlane.xlu0 %74
  %v76 = vsel %vm54, %v45, 0.0
  %77 = vadd.xlane.f32.xlu0 %v76
  %v78 = vpop.xlane.xlu0 %77
  %v79 = vsel %vm54, %v46, 0.0
  %80 = vadd.xlane.f32.xlu0 %v79
  %v81 = vpop.xlane.xlu0 %80
  %v82 = vsel %vm54, %v47, 0.0
  %83 = vadd.xlane.f32.xlu0 %v82
  %v84 = vpop.xlane.xlu0 %83
  %v85 = vsel %vm54, %v48, 0.0
  %86 = vadd.xlane.f32.xlu0 %v85
  %v87 = vpop.xlane.xlu0 %86
  %v88 = vsel %vm54, %v49, 0.0
  %89 = vadd.xlane.f32.xlu0 %v88
  %v90 = vpop.xlane.xlu0 %89
  %v91 = vsel %vm54, %v50, 0.0
  %92 = vadd.xlane.f32.xlu0 %v91
  %v93 = vpop.xlane.xlu0 %92
  %v94 = vsel %vm54, %v51, 0.0
  %95 = vadd.xlane.f32.xlu0 %v94
  %v96 = vpop.xlane.xlu0 %95
  %v97 = vsel %vm54, %v52, 0.0
  %98 = vadd.xlane.f32.xlu0 %v97
  %v99 = vpop.xlane.xlu0 %98
  %v100 = vsel %vm54, %v53, 0.0
  %101 = vadd.xlane.f32.xlu0 %v100
  %v102 = vpop.xlane.xlu0 %101
  %s103 = sld [smem:[#allocation2]]
  %v104 = vstv %s103
  %v105 = vadd.f32 %v57, %v104
  %v106 = vadd.f32 %v60, %v104
  %v107 = vadd.f32 %v63, %v104
  %v108 = vadd.f32 %v66, %v104
  %v109 = vadd.f32 %v69, %v104
  %v110 = vadd.f32 %v72, %v104
  %v111 = vadd.f32 %v75, %v104
  %v112 = vadd.f32 %v78, %v104
  %v113 = vadd.f32 %v81, %v104
  %v114 = vadd.f32 %v84, %v104
  %v115 = vadd.f32 %v87, %v104
  %v116 = vadd.f32 %v90, %v104
  %v117 = vadd.f32 %v93, %v104
  %v118 = vadd.f32 %v96, %v104
  %v119 = vadd.f32 %v99, %v104
  %v120 = vadd.f32 %v102, %v104
  %v137 = vlaneseq
  %v138 = vand.u32 %v137, 127
  %v139 = vlaneseq
  %v140 = vshrl.u32 %v139, 7
  %v141 = vsub.s32 %v138, %v140
  %v142 = vrot.slane %v105, %v141
  %v143 = vadd.s32 %v138, 4294967288
  %v144 = vlaneseq
  %v145 = vshrl.u32 %v144, 7
  %v146 = vsub.s32 %v143, %v145
  %v147 = vrot.slane %v106, %v146
  %vm148 = vcmask 130112
  %v149 = vsel %vm148, %v147, %v142
  %v150 = vadd.s32 %v138, 4294967280
  %v151 = vlaneseq
  %v152 = vshrl.u32 %v151, 7
  %v153 = vsub.s32 %v150, %v152
  %v154 = vrot.slane %v107, %v153
  %vm155 = vcmask 195712
  %v156 = vsel %vm155, %v154, %v149
  %v157 = vadd.s32 %v138, 4294967272
  %v158 = vlaneseq
  %v159 = vshrl.u32 %v158, 7
  %v160 = vsub.s32 %v157, %v159
  %v161 = vrot.slane %v108, %v160
  %vm162 = vcmask 261312
  %v163 = vsel %vm162, %v161, %v156
  %v164 = vadd.s32 %v138, 4294967264
  %v165 = vlaneseq
  %v166 = vshrl.u32 %v165, 7
  %v167 = vsub.s32 %v164, %v166
  %v168 = vrot.slane %v109, %v167
  %vm169 = vcmask 326912
  %v170 = vsel %vm169, %v168, %v163
  %v171 = vadd.s32 %v138, 4294967256
  %v172 = vlaneseq
  %v173 = vshrl.u32 %v172, 7
  %v174 = vsub.s32 %v171, %v173
  %v175 = vrot.slane %v110, %v174
  %vm176 = vcmask 392512
  %v177 = vsel %vm176, %v175, %v170
  %v178 = vadd.s32 %v138, 4294967248
  %v179 = vlaneseq
  %v180 = vshrl.u32 %v179, 7
  %v181 = vsub.s32 %v178, %v180
  %v182 = vrot.slane %v111, %v181
  %vm183 = vcmask 458112
  %v184 = vsel %vm183, %v182, %v177
  %v185 = vadd.s32 %v138, 4294967240
  %v186 = vlaneseq
  %v187 = vshrl.u32 %v186, 7
  %v188 = vsub.s32 %v185, %v187
  %v189 = vrot.slane %v112, %v188
  %vm190 = vcmask 523712
  %v191 = vsel %vm190, %v189, %v184
  %v192 = vadd.s32 %v138, 4294967232
  %v193 = vlaneseq
  %v194 = vshrl.u32 %v193, 7
  %v195 = vsub.s32 %v192, %v194
  %v196 = vrot.slane %v113, %v195
  %vm197 = vcmask 589312
  %v198 = vsel %vm197, %v196, %v191
  %v199 = vadd.s32 %v138, 4294967224
  %v200 = vlaneseq
  %v201 = vshrl.u32 %v200, 7
  %v202 = vsub.s32 %v199, %v201
  %v203 = vrot.slane %v114, %v202
  %vm204 = vcmask 654912
  %v205 = vsel %vm204, %v203, %v198
  %v206 = vadd.s32 %v138, 4294967216
  %v207 = vlaneseq
  %v208 = vshrl.u32 %v207, 7
  %v209 = vsub.s32 %v206, %v208
  %v210 = vrot.slane %v115, %v209
  %vm211 = vcmask 720512
  %v212 = vsel %vm211, %v210, %v205
  %v213 = vadd.s32 %v138, 4294967208
  %v214 = vlaneseq
  %v215 = vshrl.u32 %v214, 7
  %v216 = vsub.s32 %v213, %v215
  %v217 = vrot.slane %v116, %v216
  %vm218 = vcmask 786112
  %v219 = vsel %vm218, %v217, %v212
  %v220 = vadd.s32 %v138, 4294967200
  %v221 = vlaneseq
  %v222 = vshrl.u32 %v221, 7
  %v223 = vsub.s32 %v220, %v222
  %v224 = vrot.slane %v117, %v223
  %vm225 = vcmask 851712
  %v226 = vsel %vm225, %v224, %v219
  %v227 = vadd.s32 %v138, 4294967192
  %v228 = vlaneseq
  %v229 = vshrl.u32 %v228, 7
  %v230 = vsub.s32 %v227, %v229
  %v231 = vrot.slane %v118, %v230
  %vm232 = vcmask 917312
  %v233 = vsel %vm232, %v231, %v226
  %v234 = vadd.s32 %v138, 4294967184
  %v235 = vlaneseq
  %v236 = vshrl.u32 %v235, 7
  %v237 = vsub.s32 %v234, %v236
  %v238 = vrot.slane %v119, %v237
  %vm239 = vcmask 982912
  %v240 = vsel %vm239, %v238, %v233
  %v241 = vadd.s32 %v138, 4294967176
  %v242 = vlaneseq
  %v243 = vshrl.u32 %v242, 7
  %v244 = vsub.s32 %v241, %v243
  %v245 = vrot.slane %v120, %v244
  %vm246 = vcmask 1048512
  %v247 = vsel %vm246, %v245, %v240
  %249 = vst [vmem:[%s3] sm:$0x1] %v247
  // Predicated region
  $region14: #{linear_net.1} parent=0 // pred_check
    _
  $region15: #{linear_net.1} parent=0 // pred_check_branch
    %251 = sbr.rel (0) target = $region17
  $region16: #{linear_net.1} parent=0 // pred_region
    _
  $region17: #{linear_net.1} parent=0 // pred_fallthru
    _
  // Predicated region
  $region18: #{linear_net.1} parent=0 // pred_check
    _
  $region19: #{linear_net.1} parent=0 // pred_check_branch
    %253 = sbr.rel (0) target = $region21
  $region20: #{linear_net.1} parent=0 // pred_region
    _
  $region21: #{linear_net.1} parent=0 // pred_fallthru
    _

</llo_original>
